<compile_context>
chip_gen: v7x
topology: tpu7x:2x2x1
jax: 0.10.0
libtpu: 0.0.40
codegen_flags: <defaults>
</compile_context>

<pallas_src>
import jax
import jax.numpy as jnp
from jax import lax
from jax.experimental import pallas as pl
from jax.experimental.pallas import tpu as pltpu


def ran_decoder_kernel(xy_ref, w1d_ref, b1d_ref, w234_ref, b234_ref, out_ref):
    # Fused fc1(x) & fc1(y) + implicit concat: one MXU pass against the
    # block-diagonal weight diag(w1, w1).
    h = jnp.dot(xy_ref[...], w1d_ref[...], preferred_element_type=jnp.float32)
    # TODO(synk): dropout(p=0.2) treated as identity (eval mode); PyTorch
    # training-time RNG mask is not reproduced here.
    h = jnp.maximum(h + b1d_ref[...], 0.0)  # ReLU
    # fc2 -> fc3 -> fc4 collapsed into a single affine (precomputed in wrapper).
    out_ref[...] = (jnp.dot(h, w234_ref[...], preferred_element_type=jnp.float32)
                    + b234_ref[...])


def _round_up(v, m):
    return ((v + m - 1) // m) * m


def ran_decoder_forward(x, y, params, *, tm=1024):
    """x, y: (N, in_channel, per_dim) float32. Returns (N, 2) float32."""
    n = x.shape[0]
    x2 = x.reshape(n, -1).astype(jnp.float32)
    y2 = y.reshape(n, -1).astype(jnp.float32)
    d_in = x2.shape[1]

    (w1, b1), (w2, b2), (w3, b3), (w4, b4) = params
    oc = w1.shape[1]
    hp = lax.Precision.HIGHEST

    # ---- wrapper-side algebraic precompute (runs once, in XLA) ----
    # Collapse fc2 @ fc3 @ fc4 (no activation between them in the module).
    w34 = jnp.dot(w3, w4, precision=hp)                      # (oc, 2)
    w234 = jnp.dot(w2, w34, precision=hp)                    # (2*oc, 2)
    b234 = (jnp.dot(b2, w34, precision=hp)
            + jnp.dot(b3, w4, precision=hp) + b4)            # (1, 2)
    # Block-diagonal fc1 weight: [x2|y2] @ diag(w1, w1) == [x2@w1 | y2@w1].
    w1d = jnp.zeros((2 * d_in, 2 * oc), jnp.float32)
    w1d = w1d.at[:d_in, :oc].set(w1)
    w1d = w1d.at[d_in:, oc:].set(w1)
    b1d = jnp.concatenate([b1, b1], axis=-1)                 # (1, 2*oc)

    # Stack inputs once, outside the kernel (lane-dense, row-major).
    xy = jnp.concatenate([x2, y2], axis=-1)                  # (N, 2*d_in)

    # Batch tiling: sublane-aligned rows, pipelined over a 1-D grid.
    n_pad = _round_up(max(n, 1), 8)
    if n_pad != n:
        xy = jnp.pad(xy, ((0, n_pad - n), (0, 0)))
    tm = min(tm, n_pad)
    grid = (pl.cdiv(n_pad, tm),)

    const = lambda i: (0, 0)
    out = pl.pallas_call(
        ran_decoder_kernel,
        out_shape=jax.ShapeDtypeStruct((n_pad, 2), jnp.float32),
        grid=grid,
        in_specs=[
            pl.BlockSpec((tm, 2 * d_in), lambda i: (i, 0)),   # streamed inputs
            pl.BlockSpec(w1d.shape, const),                   # resident weights
            pl.BlockSpec(b1d.shape, const),
            pl.BlockSpec(w234.shape, const),
            pl.BlockSpec(b234.shape, const),
        ],
        out_specs=pl.BlockSpec((tm, 2), lambda i: (i, 0)),
        compiler_params=pltpu.CompilerParams(
            dimension_semantics=("parallel",)),
    )(xy, w1d, b1d, w234, b234)
    return out[:n]


def init_params(key, in_channel, per_dim, out_channel):
    """Deterministic Linear params, stored as (in_features, out_features) + (1, out)."""
    d_in = in_channel * per_dim
    dims = [(d_in, out_channel),
            (out_channel * 2, out_channel),
            (out_channel, 4),
            (4, 2)]
    params = []
    for i, (din, dout) in enumerate(dims):
        kw, kb = jax.random.split(jax.random.fold_in(key, i))
        bound = 1.0 / (din ** 0.5)   # PyTorch nn.Linear default init range
        w = jax.random.uniform(kw, (din, dout), jnp.float32, -bound, bound)
        b = jax.random.uniform(kb, (1, dout), jnp.float32, -bound, bound)
        params.append((w, b))
    return params


def reference_forward(x, y, params):
    """Pure-JAX reference (un-collapsed, mirrors the PyTorch forward)."""
    (w1, b1), (w2, b2), (w3, b3), (w4, b4) = params
    hp = lax.Precision.HIGHEST
    n = x.shape[0]
    x3 = jnp.dot(x.reshape(n, -1), w1, precision=hp) + b1
    y3 = jnp.dot(y.reshape(n, -1), w1, precision=hp) + b1
    h = jnp.maximum(jnp.concatenate([x3, y3], axis=-1), 0.0)  # dropout=identity
    h = jnp.dot(h, w2, precision=hp) + b2
    h = jnp.dot(h, w3, precision=hp) + b3
    return jnp.dot(h, w4, precision=hp) + b4


if __name__ == "__main__":
    in_channel, per_dim, out_channel = 4, 8, 32
    N = 16

    key = jax.random.PRNGKey(0)
    kx, ky, kp = jax.random.split(key, 3)
    x = jax.random.normal(kx, (N, in_channel, per_dim), jnp.float32)
    y = jax.random.normal(ky, (N, in_channel, per_dim), jnp.float32)
    params = init_params(kp, in_channel, per_dim, out_channel)

    out = jax.block_until_ready(ran_decoder_forward(x, y, params))
    ref = reference_forward(x, y, params)

    assert out.shape == (N, 2), out.shape
    max_err = float(jnp.max(jnp.abs(out - ref)))
    assert jnp.allclose(out, ref, atol=1e-3, rtol=1e-3), f"mismatch vs reference: {max_err}"
    print("KERNEL_OK")
</pallas_src>

<mosaic_0001>
module attributes {stable_mosaic.version = 11 : i64} {
  func.func @ran_decoder_kernel(%arg0: i32, %arg1: memref<16x64xf32, #tpu.memory_space<vmem>>, %arg2: memref<64x64xf32, #tpu.memory_space<vmem>>, %arg3: memref<1x64xf32, #tpu.memory_space<vmem>>, %arg4: memref<64x2xf32, #tpu.memory_space<vmem>>, %arg5: memref<1x2xf32, #tpu.memory_space<vmem>>, %arg6: memref<16x2xf32, #tpu.memory_space<vmem>>) attributes {dimension_semantics = [#tpu.dimension_semantics<parallel>], iteration_bounds = array<i64: 1>, scalar_prefetch = 0 : i64, scratch_operands = 0 : i64, tpu.core_type = #tpu.core_type<tc>, window_params = [{transform_indices = @transform_0, window_bounds = array<i64: 16, 64>}, {pipeline_mode = #tpu.pipeline_mode<synchronous>, transform_indices = @transform_1, window_bounds = array<i64: 64, 64>}, {pipeline_mode = #tpu.pipeline_mode<synchronous>, transform_indices = @transform_2, window_bounds = array<i64: 1, 64>}, {pipeline_mode = #tpu.pipeline_mode<synchronous>, transform_indices = @transform_3, window_bounds = array<i64: 64, 2>}, {pipeline_mode = #tpu.pipeline_mode<synchronous>, transform_indices = @transform_4, window_bounds = array<i64: 1, 2>}, {transform_indices = @transform_5, window_bounds = array<i64: 16, 2>}]} {
    %c0 = arith.constant 0 : index
    %c0_0 = arith.constant 0 : index
    %0 = vector.load %arg1[%c0, %c0_0] : memref<16x64xf32, #tpu.memory_space<vmem>>, vector<16x64xf32>
    %c0_1 = arith.constant 0 : index
    %c0_2 = arith.constant 0 : index
    %1 = vector.load %arg2[%c0_1, %c0_2] : memref<64x64xf32, #tpu.memory_space<vmem>>, vector<64x64xf32>
    %cst = arith.constant dense<0.000000e+00> : vector<16x64xf32>
    %2 = tpu.matmul %0, %1, %cst {dimension_numbers = #tpu.dot_dimension_numbers<[1], [0], [0], [1], [0, 0, 1, 1], [], []>} : vector<16x64xf32>, vector<64x64xf32>, vector<16x64xf32> -> vector<16x64xf32>
    %c0_3 = arith.constant 0 : index
    %c0_4 = arith.constant 0 : index
    %3 = vector.load %arg3[%c0_3, %c0_4] : memref<1x64xf32, #tpu.memory_space<vmem>>, vector<1x64xf32>
    %4 = vector.broadcast %3 : vector<1x64xf32> to vector<16x64xf32>
    %5 = arith.addf %2, %4 : vector<16x64xf32>
    %cst_5 = arith.constant 0.000000e+00 : f32
    %6 = vector.broadcast %cst_5 : f32 to vector<16x64xf32>
    %7 = arith.maximumf %5, %6 : vector<16x64xf32>
    %c0_6 = arith.constant 0 : index
    %c0_7 = arith.constant 0 : index
    %8 = vector.load %arg4[%c0_6, %c0_7] : memref<64x2xf32, #tpu.memory_space<vmem>>, vector<64x2xf32>
    %cst_8 = arith.constant dense<0.000000e+00> : vector<16x2xf32>
    %9 = tpu.matmul %7, %8, %cst_8 {dimension_numbers = #tpu.dot_dimension_numbers<[1], [0], [0], [1], [0, 0, 1, 1], [], []>} : vector<16x64xf32>, vector<64x2xf32>, vector<16x2xf32> -> vector<16x2xf32>
    %c0_9 = arith.constant 0 : index
    %c0_10 = arith.constant 0 : index
    %10 = vector.load %arg5[%c0_9, %c0_10] : memref<1x2xf32, #tpu.memory_space<vmem>>, vector<1x2xf32>
    %11 = vector.broadcast %10 : vector<1x2xf32> to vector<16x2xf32>
    %12 = arith.addf %9, %11 : vector<16x2xf32>
    %c0_11 = arith.constant 0 : index
    %c0_12 = arith.constant 0 : index
    %13 = vector.load %arg6[%c0_11, %c0_12] : memref<16x2xf32, #tpu.memory_space<vmem>>, vector<16x2xf32>
    tpu.vector_store %arg6[%c0_11, %c0_12], %12 {strides = array<i32>} : memref<16x2xf32, #tpu.memory_space<vmem>>, vector<16x2xf32>,
    return
  }
  func.func @transform_0(%arg0: i32) -> (i32, i32) {
    %c0_i32 = arith.constant 0 : i32
    %c0_i32_0 = arith.constant 0 : i32
    return %arg0, %c0_i32 : i32, i32
  }
  func.func @transform_1(%arg0: i32) -> (i32, i32) {
    %c0_i32 = arith.constant 0 : i32
    %c0_i32_0 = arith.constant 0 : i32
    %c0_i32_1 = arith.constant 0 : i32
    return %c0_i32, %c0_i32_0 : i32, i32
  }
  func.func @transform_2(%arg0: i32) -> (i32, i32) {
    %c0_i32 = arith.constant 0 : i32
    %c0_i32_0 = arith.constant 0 : i32
    %c0_i32_1 = arith.constant 0 : i32
    return %c0_i32, %c0_i32_0 : i32, i32
  }
  func.func @transform_3(%arg0: i32) -> (i32, i32) {
    %c0_i32 = arith.constant 0 : i32
    %c0_i32_0 = arith.constant 0 : i32
    %c0_i32_1 = arith.constant 0 : i32
    return %c0_i32, %c0_i32_0 : i32, i32
  }
  func.func @transform_4(%arg0: i32) -> (i32, i32) {
    %c0_i32 = arith.constant 0 : i32
    %c0_i32_0 = arith.constant 0 : i32
    %c0_i32_1 = arith.constant 0 : i32
    return %c0_i32, %c0_i32_0 : i32, i32
  }
  func.func @transform_5(%arg0: i32) -> (i32, i32) {
    %c0_i32 = arith.constant 0 : i32
    %c0_i32_0 = arith.constant 0 : i32
    return %arg0, %c0_i32 : i32, i32
  }
}

</mosaic_0001>

<llo_original>
// kernel: tpu_custom_call.1
$region0: #{tpu_custom_call.1}
  #allocation0 [shape = 'u32[]', space=smem, size = 0x4, offset = 0x4, fixed_abs, tag = 'smem constant byte address 0x4 - core index']
  #allocation1 [shape = 'u32[144,128]{1,0:T(1,128)}', space=vmem, size = 0x12000, scoped, tag = 'internal scratch']
  %s0 = inlined_call_operand.hbm [shape: f32[16,64], index: 0, kind: input, shape index: {}]
  %s1 = inlined_call_operand.vmem [shape: f32[64,64], index: 1, kind: input, shape index: {}]
  %s2 = inlined_call_operand.vmem [shape: f32[1,64], index: 2, kind: input, shape index: {}]
  %s3 = inlined_call_operand.vmem [shape: f32[64,2], index: 3, kind: input, shape index: {}]
  %s4 = inlined_call_operand.vmem [shape: f32[1,2], index: 4, kind: input, shape index: {}]
  %s5 = inlined_call_operand.vmem [shape: f32[16,2], index: 5, kind: output, shape index: {}]
  %s6 = sld [smem:[#allocation0]]
  $region34: #{tpu_custom_call.1} parent=0
    _
  %s8 = ssub.s32 1, %s6
  %s9 = scalar_select 0, %s8, %s6
  $region1: #{tpu_custom_call.1} parent=0
    #allocation2 [shape = 'u8[8192]{0}', space=vmem, size = 0x2000, scoped, tag = 'input window, operand 0, single buffered']
    #allocation3 [shape = 's32[1]{0}', space=sflag, size = 0x4, scoped, tag = 'scoped memory for tpu_custom_call.1']
    %10 = vsyncpa [#allocation3], 0
    // Predicated region
    $region2: #{tpu_custom_call.1} parent=1 // pred_check
      _
    $region3: #{tpu_custom_call.1} parent=1 // pred_check_branch
      %12 = sbr.rel (0) target = $region5
    $region4: #{tpu_custom_call.1} parent=1 // pred_region
      %s14 = ssub.s32 256, 256
      %15 = vsyncadd [#allocation3], %s14
      %s16 = sshll.u32 [#allocation2], 4
      %s17 = int_to_ptr.vmem [resolvable:$true] %s16
      %22 = dma.hbm_to_vmem [thread:$0]  %s0, 256, %s17, [#allocation3], 128, 128, 8
    $region5: #{tpu_custom_call.1} parent=1 // pred_fallthru
      _
    // Predicated region
    $region6: #{tpu_custom_call.1} parent=1 // pred_check
      _
    $region7: #{tpu_custom_call.1} parent=1 // pred_check_branch
      %24 = sbr.rel (0) target = $region9
    $region8: #{tpu_custom_call.1} parent=1 // pred_region
      _
    $region9: #{tpu_custom_call.1} parent=1 // pred_fallthru
      _
    // Predicated region
    $region10: #{tpu_custom_call.1} parent=1 // pred_check
      _
    $region11: #{tpu_custom_call.1} parent=1 // pred_check_branch
      %26 = sbr.rel (0) target = $region13
    $region12: #{tpu_custom_call.1} parent=1 // pred_region
      _
    $region13: #{tpu_custom_call.1} parent=1 // pred_fallthru
      _
    // Predicated region
    $region14: #{tpu_custom_call.1} parent=1 // pred_check
      _
    $region15: #{tpu_custom_call.1} parent=1 // pred_check_branch
      %28 = sbr.rel (0) target = $region17
    $region16: #{tpu_custom_call.1} parent=1 // pred_region
      _
    $region17: #{tpu_custom_call.1} parent=1 // pred_fallthru
      _
    // Predicated region
    $region18: #{tpu_custom_call.1} parent=1 // pred_check
      _
    $region19: #{tpu_custom_call.1} parent=1 // pred_check_branch
      %30 = sbr.rel (0) target = $region21
    $region20: #{tpu_custom_call.1} parent=1 // pred_region
      _
    $region21: #{tpu_custom_call.1} parent=1 // pred_fallthru
      _
    // Predicated region
    $region22: #{tpu_custom_call.1} parent=1 // pred_check
      _
    $region23: #{tpu_custom_call.1} parent=1 // pred_check_branch
      %32 = sbr.rel (0) target = $region25
    $region24: #{tpu_custom_call.1} parent=1 // pred_region
      %33 = dma.done [#allocation3], 256
    $region25: #{tpu_custom_call.1} parent=1 // pred_fallthru
      _
    %v34 = vld [vmem:[#allocation2] sm:$0xff]
    %v35 = vld [vmem:[#allocation2 + $0x8] sm:$0xff]
    %v36 = vld [vmem:[%s1] sm:$0xff]
    %v37 = vld [vmem:[%s1 + $0x8] sm:$0xff]
    %v38 = vld [vmem:[%s1 + $0x10] sm:$0xff]
    %v39 = vld [vmem:[%s1 + $0x18] sm:$0xff]
    %v40 = vld [vmem:[%s1 + $0x20] sm:$0xff]
    %v41 = vld [vmem:[%s1 + $0x28] sm:$0xff]
    %v42 = vld [vmem:[%s1 + $0x30] sm:$0xff]
    %v43 = vld [vmem:[%s1 + $0x38] sm:$0xff]
    %v44 = vld [vmem:[%s2] sm:$0x1]
    %v46 = vlaneseq
    %v47 = vshrl.u32 %v46, 7
    %v48 = vsub.s32 0, %v47
    %v49 = vrot.slane %v44, %v48
    %vm51 = vcmask 523264
    %v53 = vsel %vm51, %v34, 0
    %v56 = vsel %vm51, %v35, 0
    %58 = vmatprep.subr.mxu0 0.0
    %59 = vmatpush1.msra.mxu0 %v36
    %60 = vmatprep.subr.mxu0 0.0
    %61 = vmatpush1.msra.mxu0 %v37
    %62 = vmatprep.subr.mxu0 0.0
    %63 = vmatpush1.msra.mxu0 %v38
    %64 = vmatprep.subr.mxu0 0.0
    %65 = vmatpush1.msra.mxu0 %v39
    %66 = vmatprep.subr.mxu0 0.0
    %67 = vmatpush1.msra.mxu0 %v40
    %68 = vmatprep.subr.mxu0 0.0
    %69 = vmatpush1.msra.mxu0 %v41
    %70 = vmatprep.subr.mxu0 0.0
    %71 = vmatpush1.msra.mxu0 %v42
    %72 = vmatprep.subr.mxu0 0.0
    %73 = vmatpush1.msra.mxu0 %v43
    %74 = vmatprep.subr.mxu0 0.0
    %75 = vmatpush1.msra.mxu0 0.0
    %76 = vmatprep.subr.mxu0 0.0
    %77 = vmatpush1.msra.mxu0 0.0
    %78 = vmatprep.subr.mxu0 0.0
    %79 = vmatpush1.msra.mxu0 0.0
    %80 = vmatprep.subr.mxu0 0.0
    %81 = vmatpush1.msra.mxu0 0.0
    %82 = vmatprep.subr.mxu0 0.0
    %83 = vmatpush1.msra.mxu0 0.0
    %84 = vmatprep.subr.mxu0 0.0
    %85 = vmatpush1.msra.mxu0 0.0
    %86 = vmatprep.subr.mxu0 0.0
    %87 = vmatpush1.msra.mxu0 0.0
    %88 = vmatprep.subr.mxu0 0.0
    %89 = vmatpush1.msra.mxu0 0.0
    %90 = vmatprep.subr.mxu0 0.0
    %91 = vmatpush1.msra.mxu0 0.0
    %92 = vmatprep.subr.mxu0 0.0
    %93 = vmatpush1.msra.mxu0 0.0
    %94 = vmatprep.subr.mxu0 0.0
    %95 = vmatpush1.msra.mxu0 0.0
    %96 = vmatprep.subr.mxu0 0.0
    %97 = vmatpush1.msra.mxu0 0.0
    %98 = vmatprep.subr.mxu0 0.0
    %99 = vmatpush1.msra.mxu0 0.0
    %100 = vmatprep.subr.mxu0 0.0
    %101 = vmatpush1.msra.mxu0 0.0
    %102 = vmatprep.subr.mxu0 0.0
    %103 = vmatpush1.msra.mxu0 0.0
    %104 = vmatprep.subr.mxu0 0.0
    %105 = vmatpush1.msra.mxu0 0.0
    %106 = vmatprep.subr.mxu0 0.0
    %107 = vmatpush1.msra.mxu0 0.0
    %108 = vmatprep.subr.mxu0 0.0
    %109 = vmatpush1.msra.mxu0 0.0
    %110 = vmatprep.subr.mxu0 0.0
    %111 = vmatpush1.msra.mxu0 0.0
    %112 = vmatprep.subr.mxu0 0.0
    %113 = vmatpush1.msra.mxu0 0.0
    %114 = vmatprep.subr.mxu0 0.0
    %115 = vmatpush1.msra.mxu0 0.0
    %116 = vmatprep.subr.mxu0 0.0
    %117 = vmatpush1.msra.mxu0 0.0
    %118 = vmatprep.subr.mxu0 0.0
    %119 = vmatpush1.msra.mxu0 0.0
    %120 = vmatprep.subr.mxu0 0.0
    %121 = vmatpush1.msra.mxu0 0.0
    %122 = vmatprep.mubr.f32.mxu0 0.0
    %123 = vmatmul.mubr.f32.gmra.mrb[0].mxu0 %v53
    %v124 = vpop.f32.mrb[0].mxu0
    %v125 = vadd.f32 %v49, %v124
    %v126 = vpop.f32.mrb[0].mxu0
    %127 = vmatprep.mubr.f32.mxu0 0.0
    %128 = vmatmul.mubr.f32.gmra.mrb[0].mxu0 %v56
    %v129 = vpop.f32.mrb[0].mxu0
    %v130 = vadd.f32 %v49, %v129
    %v131 = vpop.f32.mrb[0].mxu0
    %132 = vdwg.mxu0
    %v133 = vmax.f32 %v125, 0.0
    %v134 = vmax.f32 %v130, 0.0
    %v135 = vld [vmem:[%s3] sm:$0xff]
    %v136 = vld [vmem:[%s3 + $0x8] sm:$0xff]
    %v137 = vld [vmem:[%s3 + $0x10] sm:$0xff]
    %v138 = vld [vmem:[%s3 + $0x18] sm:$0xff]
    %v139 = vld [vmem:[%s3 + $0x20] sm:$0xff]
    %v140 = vld [vmem:[%s3 + $0x28] sm:$0xff]
    %v141 = vld [vmem:[%s3 + $0x30] sm:$0xff]
    %v142 = vld [vmem:[%s3 + $0x38] sm:$0xff]
    %v143 = vld [vmem:[%s4] sm:$0x1]
    %v145 = vlaneseq
    %v146 = vshrl.u32 %v145, 7
    %v147 = vsub.s32 0, %v146
    %v148 = vrot.slane %v143, %v147
    %v151 = vsel %vm51, %v133, 0
    %v154 = vsel %vm51, %v134, 0
    %156 = vmatprep.subr.mxu0 0.0
    %157 = vmatpush1.msra.mxu0 %v135
    %158 = vmatprep.subr.mxu0 0.0
    %159 = vmatpush1.msra.mxu0 %v136
    %160 = vmatprep.subr.mxu0 0.0
    %161 = vmatpush1.msra.mxu0 %v137
    %162 = vmatprep.subr.mxu0 0.0
    %163 = vmatpush1.msra.mxu0 %v138
    %164 = vmatprep.subr.mxu0 0.0
    %165 = vmatpush1.msra.mxu0 %v139
    %166 = vmatprep.subr.mxu0 0.0
    %167 = vmatpush1.msra.mxu0 %v140
    %168 = vmatprep.subr.mxu0 0.0
    %169 = vmatpush1.msra.mxu0 %v141
    %170 = vmatprep.subr.mxu0 0.0
    %171 = vmatpush1.msra.mxu0 %v142
    %172 = vmatprep.subr.mxu0 0.0
    %173 = vmatpush1.msra.mxu0 0.0
    %174 = vmatprep.subr.mxu0 0.0
    %175 = vmatpush1.msra.mxu0 0.0
    %176 = vmatprep.subr.mxu0 0.0
    %177 = vmatpush1.msra.mxu0 0.0
    %178 = vmatprep.subr.mxu0 0.0
    %179 = vmatpush1.msra.mxu0 0.0
    %180 = vmatprep.subr.mxu0 0.0
    %181 = vmatpush1.msra.mxu0 0.0
    %182 = vmatprep.subr.mxu0 0.0
    %183 = vmatpush1.msra.mxu0 0.0
    %184 = vmatprep.subr.mxu0 0.0
    %185 = vmatpush1.msra.mxu0 0.0
    %186 = vmatprep.subr.mxu0 0.0
    %187 = vmatpush1.msra.mxu0 0.0
    %188 = vmatprep.subr.mxu0 0.0
    %189 = vmatpush1.msra.mxu0 0.0
    %190 = vmatprep.subr.mxu0 0.0
    %191 = vmatpush1.msra.mxu0 0.0
    %192 = vmatprep.subr.mxu0 0.0
    %193 = vmatpush1.msra.mxu0 0.0
    %194 = vmatprep.subr.mxu0 0.0
    %195 = vmatpush1.msra.mxu0 0.0
    %196 = vmatprep.subr.mxu0 0.0
    %197 = vmatpush1.msra.mxu0 0.0
    %198 = vmatprep.subr.mxu0 0.0
    %199 = vmatpush1.msra.mxu0 0.0
    %200 = vmatprep.subr.mxu0 0.0
    %201 = vmatpush1.msra.mxu0 0.0
    %202 = vmatprep.subr.mxu0 0.0
    %203 = vmatpush1.msra.mxu0 0.0
    %204 = vmatprep.subr.mxu0 0.0
    %205 = vmatpush1.msra.mxu0 0.0
    %206 = vmatprep.subr.mxu0 0.0
    %207 = vmatpush1.msra.mxu0 0.0
    %208 = vmatprep.subr.mxu0 0.0
    %209 = vmatpush1.msra.mxu0 0.0
    %210 = vmatprep.subr.mxu0 0.0
    %211 = vmatpush1.msra.mxu0 0.0
    %212 = vmatprep.subr.mxu0 0.0
    %213 = vmatpush1.msra.mxu0 0.0
    %214 = vmatprep.subr.mxu0 0.0
    %215 = vmatpush1.msra.mxu0 0.0
    %216 = vmatprep.subr.mxu0 0.0
    %217 = vmatpush1.msra.mxu0 0.0
    %218 = vmatprep.subr.mxu0 0.0
    %219 = vmatpush1.msra.mxu0 0.0
    %220 = vmatprep.mubr.f32.mxu0 0.0
    %221 = vmatmul.mubr.f32.gmra.mrb[0].mxu0 %v151
    %v222 = vpop.f32.mrb[0].mxu0
    %v223 = vadd.f32 %v148, %v222
    %v224 = vpop.f32.mrb[0].mxu0
    %225 = vmatprep.mubr.f32.mxu0 0.0
    %226 = vmatmul.mubr.f32.gmra.mrb[0].mxu0 %v154
    %v227 = vpop.f32.mrb[0].mxu0
    %v228 = vadd.f32 %v148, %v227
    %v229 = vpop.f32.mrb[0].mxu0
    %230 = vdwg.mxu0
    %vm231 = vcmask 15360
    %232 = vst.msk [vmem:[%s5] sm:$0xff] %vm231, %v223
    %233 = vst.msk [vmem:[%s5 + $0x8] sm:$0xff] %vm231, %v228
    // Predicated region
    $region26: #{tpu_custom_call.1} parent=1 // pred_check
      _
    $region27: #{tpu_custom_call.1} parent=1 // pred_check_branch
      %235 = sbr.rel (0) target = $region29
    $region28: #{tpu_custom_call.1} parent=1 // pred_region
      _
    $region29: #{tpu_custom_call.1} parent=1 // pred_fallthru
      _
    // Predicated region
    $region30: #{tpu_custom_call.1} parent=1 // pred_check
      _
    $region31: #{tpu_custom_call.1} parent=1 // pred_check_branch
      %237 = sbr.rel (0) target = $region33
    $region32: #{tpu_custom_call.1} parent=1 // pred_region
      _
    $region33: #{tpu_custom_call.1} parent=1 // pred_fallthru
      _
    %238 = vsyncpa [#allocation3], 1

</llo_original>
